<compile_context>
chip_gen: v7x
topology: tpu7x:2x2x1
jax: 0.10.0
libtpu: 0.0.40
codegen_flags: <defaults>
</compile_context>

<pallas_src>
import math

import jax
import jax.numpy as jnp
from jax import lax
from jax.experimental import pallas as pl
from jax.experimental.pallas import tpu as pltpu


def _round_up(x, m):
    return ((x + m - 1) // m) * m


def _tile_bytes(rows, cols, itemsize):
    # VMEM layout padding: sublane granularity 8 (f32) / 16 (bf16) / 32 (int8),
    # lane granularity 128.
    sublane = 8 * max(1, 4 // itemsize)
    return _round_up(rows, sublane) * _round_up(cols, 128) * itemsize


def _vmem_capacity_bytes():
    try:
        cap = getattr(pltpu.get_tpu_info(), "vmem_capacity_bytes", None)
        if cap:
            return int(cap)
    except Exception:
        pass
    return 64 * 2**20  # conservative default: v7x per-TensorCore VMEM


def _choose_tile(N, tile_n, fits):
    """Pick (row_tile, padded_N).

    Single tile if the whole graph fits one tile; otherwise multiples of 128
    (keeps every block's minor dims (8,128)-aligned and the transposed-output
    store lane-dense).  Candidates are ordered by least adjacency padding,
    stepping down until the double-buffered working set fits VMEM.
    """
    n8 = _round_up(N, 8)
    cands = []
    if n8 <= max(tile_n, 8):
        cands.append((n8, n8))
    t = 128
    while t < n8 and t <= max(tile_n, 128):
        cands.append((t, _round_up(N, t)))
        t += 128
    if not cands:
        cands.append((128, _round_up(N, 128)))
    cands.sort(key=lambda c: (c[1], -c[0]))  # least padding, then biggest tile
    for tn, n_pad in cands:
        if fits(tn, n_pad):
            return tn, n_pad
    return min(cands)  # smallest tile; let the compiler report VMEM pressure


def _gcn_kernel(support_t_ref, adj_ref, out_ref):
    """One (batch, row-tile) grid step.

    support_t_ref: (1, D_out, Np)  (x @ W)^T for this graph, compute dtype
    adj_ref:       (1, TN, Np)     row tile of the dense adjacency, compute dtype
    out_ref:       (1, D_out, TN)  transposed output tile (lane-dense minor dim)
    """
    # out^T = support^T @ adj_tile^T : contract over the node axis of both
    # operands (q @ k.T style), f32 MXU accumulation, then ReLU.
    out_t = lax.dot_general(
        support_t_ref[0],
        adj_ref[0],
        dimension_numbers=(((1,), (1,)), ((), ())),
        preferred_element_type=jnp.float32,
    )
    out_ref[0] = jnp.maximum(out_t, 0.0).astype(out_ref.dtype)


def graph_convolution(x, adj, w, *, tile_n=512, compute_dtype=jnp.bfloat16):
    """x: (B, N, D_in), adj: (B, N, N), w: (D_in, D_out). Returns (B, N, D_out) f32."""
    B, N, d_in = x.shape
    d_out = w.shape[1]
    assert adj.shape == (B, N, N)
    assert w.shape == (d_in, d_out)

    itemsize = jnp.dtype(compute_dtype).itemsize

    # support^T = (x @ W)^T : (B, D_out, N).  Tiny compared with the adjacency
    # stream, so compute once in XLA at high precision, then narrow for the MXU.
    support_t = jnp.einsum(
        "bnd,do->bon",
        x.astype(jnp.float32),
        w.astype(jnp.float32),
        precision=jax.lax.Precision.HIGHEST,
    ).astype(compute_dtype)
    adj_c = adj.astype(compute_dtype)  # halves HBM traffic on the dominant stream

    # ---- VMEM budget / tile selection --------------------------------------
    vmem_cap = _vmem_capacity_bytes()
    usable = (vmem_cap * 3) // 4  # headroom for compiler-internal scratch

    def budget(tn, n_pad):
        return 2 * (
            _tile_bytes(tn, n_pad, itemsize)       # adjacency row slab (dbl-buffered)
            + _tile_bytes(d_out, n_pad, itemsize)  # support^T slab
            + _tile_bytes(d_out, tn, 4)            # f32 output tile
        )

    tn, n_pad = _choose_tile(N, tile_n, lambda t, p: budget(t, p) <= usable)
    vmem_limit = int(min(usable, max(32 * 2**20, budget(tn, n_pad) + (2 << 20))))

    # ---- exact zero padding -------------------------------------------------
    # Padded support^T columns are zero and padded adjacency columns are zero,
    # so padded contraction terms vanish; padded output rows are sliced off.
    if n_pad != N:
        support_t = jnp.pad(support_t, ((0, 0), (0, 0), (0, n_pad - N)))
        adj_c = jnp.pad(adj_c, ((0, 0), (0, n_pad - N), (0, n_pad - N)))

    grid = (B, n_pad // tn)

    out_t = pl.pallas_call(
        _gcn_kernel,
        out_shape=jax.ShapeDtypeStruct((B, d_out, n_pad), jnp.float32),
        grid_spec=pltpu.PrefetchScalarGridSpec(
            num_scalar_prefetch=0,
            grid=grid,
            in_specs=[
                pl.BlockSpec((1, d_out, n_pad), lambda b, t: (b, 0, 0)),
                pl.BlockSpec((1, tn, n_pad), lambda b, t: (b, t, 0)),
            ],
            out_specs=pl.BlockSpec((1, d_out, tn), lambda b, t: (b, 0, t)),
        ),
        compiler_params=pltpu.CompilerParams(
            # No cross-step dependency remains -> both axes shard across cores.
            dimension_semantics=("parallel", "parallel"),
            vmem_limit_bytes=vmem_limit,
        ),
    )(support_t, adj_c)

    # (B, D_out, N) -> (B, N, D_out); negligible vs the adjacency stream.
    return jnp.swapaxes(out_t, 1, 2)[:, :N, :]


def xavier_uniform(key, fan_in, fan_out, dtype=jnp.float32):
    limit = math.sqrt(6.0 / (fan_in + fan_out))
    return jax.random.uniform(key, (fan_in, fan_out), dtype,
                              minval=-limit, maxval=limit)


def reference_forward(x, adj, w):
    support = jnp.einsum("bnd,do->bno", x, w,
                         precision=jax.lax.Precision.HIGHEST)
    out = jnp.einsum("bnm,bmo->bno", adj, support,
                     precision=jax.lax.Precision.HIGHEST)
    return jax.nn.relu(out)


def _make_inputs(key, B, N, d_in, d_out):
    kx, ka, kw = jax.random.split(key, 3)
    x = jax.random.normal(kx, (B, N, d_in), dtype=jnp.float32)
    a = jax.random.uniform(ka, (B, N, N), dtype=jnp.float32)
    adj = a / jnp.sum(a, axis=-1, keepdims=True)   # row-normalized adjacency
    w = xavier_uniform(kw, d_in, d_out)            # (in, out) == Linear.weight.T
    return x, adj, w


if __name__ == "__main__":
    # Case 1: small graphs consistent with the module (B=2, N=8, in=32, out=16),
    # f32 compute path for a tight correctness check.
    x, adj, w = _make_inputs(jax.random.PRNGKey(0), B=2, N=8, d_in=32, d_out=16)
    out = jax.block_until_ready(
        graph_convolution(x, adj, w, compute_dtype=jnp.float32))
    ref = reference_forward(x, adj, w)
    assert out.shape == ref.shape
    assert jnp.allclose(out, ref, atol=1e-4, rtol=1e-4), "case1 mismatch vs reference"

    # Case 2: default bf16 adjacency/support path (halved HBM traffic),
    # N=200 single row tile; f32 accumulation -> loose-but-meaningful tolerance.
    x2, adj2, w2 = _make_inputs(jax.random.PRNGKey(1), B=1, N=200, d_in=32, d_out=16)
    out2 = jax.block_until_ready(graph_convolution(x2, adj2, w2))
    ref2 = reference_forward(x2, adj2, w2)
    assert out2.shape == ref2.shape
    assert jnp.allclose(out2, ref2, atol=2e-2, rtol=2e-2), "case2 mismatch vs reference"

    # Case 3: forced multi-row-tile grid (tile_n=128 -> grid (1, 2), N padded
    # 200 -> 256), f32 compute for an exact check of the tiled path.
    out3 = jax.block_until_ready(
        graph_convolution(x2, adj2, w2, tile_n=128, compute_dtype=jnp.float32))
    assert out3.shape == ref2.shape
    assert jnp.allclose(out3, ref2, atol=1e-4, rtol=1e-4), "case3 mismatch vs reference"

    print("KERNEL_OK")
</pallas_src>

<mosaic_0001>
module attributes {stable_mosaic.version = 11 : i64} {
  func.func @_gcn_kernel(%arg0: i32, %arg1: i32, %arg2: memref<1x16x8xf32, #tpu.memory_space<vmem>>, %arg3: memref<1x8x8xf32, #tpu.memory_space<vmem>>, %arg4: memref<1x16x8xf32, #tpu.memory_space<vmem>>) attributes {dimension_semantics = [#tpu.dimension_semantics<parallel>, #tpu.dimension_semantics<parallel>], iteration_bounds = array<i64: 2, 1>, scalar_prefetch = 0 : i64, scratch_operands = 0 : i64, tpu.core_type = #tpu.core_type<tc>, window_params = [{transform_indices = @transform_0, window_bounds = array<i64: 1, 16, 8>}, {transform_indices = @transform_1, window_bounds = array<i64: 1, 8, 8>}, {transform_indices = @transform_2, window_bounds = array<i64: 1, 16, 8>}]} {
    %c0 = arith.constant 0 : index
    %c0_0 = arith.constant 0 : index
    %c0_1 = arith.constant 0 : index
    %0 = vector.load %arg2[%c0, %c0_0, %c0_1] : memref<1x16x8xf32, #tpu.memory_space<vmem>>, vector<1x16x8xf32>
    %1 = vector.shape_cast %0 : vector<1x16x8xf32> to vector<16x8xf32>
    %c0_2 = arith.constant 0 : index
    %c0_3 = arith.constant 0 : index
    %c0_4 = arith.constant 0 : index
    %2 = vector.load %arg3[%c0_2, %c0_3, %c0_4] : memref<1x8x8xf32, #tpu.memory_space<vmem>>, vector<1x8x8xf32>
    %3 = vector.shape_cast %2 : vector<1x8x8xf32> to vector<8x8xf32>
    %cst = arith.constant dense<0.000000e+00> : vector<16x8xf32>
    %4 = tpu.matmul %1, %3, %cst {dimension_numbers = #tpu.dot_dimension_numbers<[1], [1], [0], [0], [0, 0, 1, 0], [], []>} : vector<16x8xf32>, vector<8x8xf32>, vector<16x8xf32> -> vector<16x8xf32>
    %cst_5 = arith.constant 0.000000e+00 : f32
    %5 = vector.broadcast %cst_5 : f32 to vector<16x8xf32>
    %6 = arith.maximumf %4, %5 : vector<16x8xf32>
    %c0_6 = arith.constant 0 : index
    %c0_7 = arith.constant 0 : index
    %c0_8 = arith.constant 0 : index
    %7 = vector.load %arg4[%c0_6, %c0_7, %c0_8] : memref<1x16x8xf32, #tpu.memory_space<vmem>>, vector<1x16x8xf32>
    %8 = vector.shape_cast %7 : vector<1x16x8xf32> to vector<16x8xf32>
    %9 = vector.shape_cast %6 : vector<16x8xf32> to vector<1x16x8xf32>
    tpu.vector_store %arg4[%c0_6, %c0_7, %c0_8], %9 {strides = array<i32>} : memref<1x16x8xf32, #tpu.memory_space<vmem>>, vector<1x16x8xf32>,
    return
  }
  func.func @transform_0(%arg0: i32, %arg1: i32) -> (i32, i32, i32) {
    %c0_i32 = arith.constant 0 : i32
    %c0_i32_0 = arith.constant 0 : i32
    %c0_i32_1 = arith.constant 0 : i32
    return %arg0, %c0_i32, %c0_i32_0 : i32, i32, i32
  }
  func.func @transform_1(%arg0: i32, %arg1: i32) -> (i32, i32, i32) {
    %c0_i32 = arith.constant 0 : i32
    %c0_i32_0 = arith.constant 0 : i32
    return %arg0, %arg1, %c0_i32 : i32, i32, i32
  }
  func.func @transform_2(%arg0: i32, %arg1: i32) -> (i32, i32, i32) {
    %c0_i32 = arith.constant 0 : i32
    %c0_i32_0 = arith.constant 0 : i32
    return %arg0, %c0_i32, %arg1 : i32, i32, i32
  }
}

</mosaic_0001>

<llo_original>
// kernel: tpu_custom_call.1
$region0: #{tpu_custom_call.1}
  #allocation0 [shape = 'u32[]', space=smem, size = 0x4, offset = 0x4, fixed_abs, tag = 'smem constant byte address 0x4 - core index']
  #allocation1 [shape = 'u32[144,128]{1,0:T(1,128)}', space=vmem, size = 0x12000, scoped, tag = 'internal scratch']
  %s0 = inlined_call_operand.vmem [shape: f32[2,16,8], index: 0, kind: input, shape index: {}]
  %s1 = inlined_call_operand.vmem [shape: f32[2,8,8], index: 1, kind: input, shape index: {}]
  %s2 = inlined_call_operand.vmem [shape: f32[2,16,8], index: 2, kind: output, shape index: {}]
  %s3 = sld [smem:[#allocation0]]
  $region41: #{tpu_custom_call.1} parent=0
    _
  %s5 = ssub.s32 1, %s3
  %s6 = scalar_select 0, %s5, %s3
  loop: start=0, step=1, limit=4
  $region2: #{tpu_custom_call.1} parent=0 // loop_pre_header
    _
  $region3: #{tpu_custom_call.1} parent=0 // loop_header
    %s8 = sphi 0, %s12
    %p9 = scmp.ge.s32.totalorder %s8, 4
    %s15 = sphi 0, %s27
    %s16 = sphi 0, %s23
    %s17 = sphi 0, %s15
    %s18 = sphi 0, %s16
    %s19 = sphi 0, %s17
    %s20 = sphi 0, %s18
    %s30 = sphi 0, %s32
    %s33 = sphi 0, %s30
    %s34 = sphi 0, %s33
    %s50 = sphi 0, %s34
    %s58 = sphi 0, %s60
    %s61 = sphi 0, %s58
    %s62 = sphi 0, %s61
    %s78 = sphi 0, %s62
    %s86 = sphi 0, %s88
    %s89 = sphi 0, %s86
    %s90 = sphi 0, %s89
    %s106 = sphi 0, %s90
  $region4: #{tpu_custom_call.1} parent=0 // loop_header_branch
    %11 = sbr.rel (%p9) target = $region8
  $region5: #{tpu_custom_call.1} parent=0 // loop_body
    %s13 = ssub.s32 %s8, 1
    %s14 = ssub.s32 %s8, 2
    %s21 = sadd.s32 1, %s16
    %p22 = scmp.ge.s32.totalorder %s21, 1
    %s23 = scalar_select %p22, 0, %s21
    %s24 = sadd.s32 1, %s15
    %s25 = scalar_select %p22, %s24, %s15
    %p26 = scmp.ge.s32.totalorder %s25, 2
    %s27 = scalar_select %p26, 0, %s25
    %s28 = ssub.s32 %s15, %s27
    %p29 = scmp.eq.s32.totalorder %s28, 0
    %s31 = sadd.s32 %s30, 1
    %s32 = scalar_select %p29, %s30, %s31
    %p35 = pneg %p29
    %p36 = scmp.eq.s32.totalorder %s8, 1
    %p37 = por %p35, %p36
    %p38 = scmp.ne.s32.totalorder %s30, %s33
    %p39 = scmp.eq.s32.totalorder %s8, 0
    %p40 = por %p38, %p39
    %p41 = scmp.ne.s32.totalorder %s30, %s33
    %p42 = scmp.eq.s32.totalorder %s13, 1
    %p43 = por %p41, %p42
    %p44 = scmp.ne.s32.totalorder %s33, %s34
    %p45 = scmp.eq.s32.totalorder %s13, 0
    %p46 = por %p44, %p45
    %p47 = scmp.ne.s32.totalorder %s33, %s34
    %p48 = scmp.eq.s32.totalorder %s14, 1
    %p49 = por %p47, %p48
    %p51 = scmp.ne.s32.totalorder %s34, %s50
    %p52 = scmp.eq.s32.totalorder %s14, 0
    %p53 = por %p51, %p52
    %s54 = ssub.s32 %s15, %s27
    %s55 = ssub.s32 %s16, %s23
    %s56 = sor.u32 %s54, %s55
    %p57 = scmp.eq.s32.totalorder %s56, 0
    %s59 = sadd.s32 %s58, 1
    %s60 = scalar_select %p57, %s58, %s59
    %p63 = pneg %p57
    %p64 = scmp.eq.s32.totalorder %s8, 1
    %p65 = por %p63, %p64
    %p66 = scmp.ne.s32.totalorder %s58, %s61
    %p67 = scmp.eq.s32.totalorder %s8, 0
    %p68 = por %p66, %p67
    %p69 = scmp.ne.s32.totalorder %s58, %s61
    %p70 = scmp.eq.s32.totalorder %s13, 1
    %p71 = por %p69, %p70
    %p72 = scmp.ne.s32.totalorder %s61, %s62
    %p73 = scmp.eq.s32.totalorder %s13, 0
    %p74 = por %p72, %p73
    %p75 = scmp.ne.s32.totalorder %s61, %s62
    %p76 = scmp.eq.s32.totalorder %s14, 1
    %p77 = por %p75, %p76
    %p79 = scmp.ne.s32.totalorder %s62, %s78
    %p80 = scmp.eq.s32.totalorder %s14, 0
    %p81 = por %p79, %p80
    %s82 = ssub.s32 %s15, %s27
    %s83 = ssub.s32 %s16, %s23
    %s84 = sor.u32 %s82, %s83
    %p85 = scmp.eq.s32.totalorder %s84, 0
    %s87 = sadd.s32 %s86, 1
    %s88 = scalar_select %p85, %s86, %s87
    %p91 = pneg %p85
    %p92 = scmp.eq.s32.totalorder %s8, 1
    %p93 = por %p91, %p92
    %p94 = scmp.ne.s32.totalorder %s86, %s89
    %p95 = scmp.eq.s32.totalorder %s8, 0
    %p96 = por %p94, %p95
    %p97 = scmp.ne.s32.totalorder %s86, %s89
    %p98 = scmp.eq.s32.totalorder %s13, 1
    %p99 = por %p97, %p98
    %p100 = scmp.ne.s32.totalorder %s89, %s90
    %p101 = scmp.eq.s32.totalorder %s13, 0
    %p102 = por %p100, %p101
    %p103 = scmp.ne.s32.totalorder %s89, %s90
    %p104 = scmp.eq.s32.totalorder %s14, 1
    %p105 = por %p103, %p104
    %p107 = scmp.ne.s32.totalorder %s90, %s106
    %p108 = scmp.eq.s32.totalorder %s14, 0
    %p109 = por %p107, %p108
    %p110 = scmp.le.s32.totalorder 1, %s8
    %p111 = scmp.lt.s32.totalorder %s8, 3
    %p112 = pnand %p110, %p111
    %p113 = pneg %p112
    // Predicated region
    $region9: #{tpu_custom_call.1} parent=5 // pred_check
      _
    $region10: #{tpu_custom_call.1} parent=5 // pred_check_branch
      %115 = sbr.rel (%p112) target = $region12
    $region11: #{tpu_custom_call.1} parent=5 // pred_region
      %s116 = ssub.s32 %s8, 1
    $region12: #{tpu_custom_call.1} parent=5 // pred_fallthru
      _
    %p117 = scmp.lt.s32.totalorder %s8, 2
    // Predicated region
    $region13: #{tpu_custom_call.1} parent=5 // pred_check
      %p118 = pneg %p117
    $region14: #{tpu_custom_call.1} parent=5 // pred_check_branch
      %120 = sbr.rel (%p118) target = $region16
    $region15: #{tpu_custom_call.1} parent=5 // pred_region
      // Predicated region
      $region17: #{tpu_custom_call.1} parent=15 // pred_check
        %p121 = pneg %p40
      $region18: #{tpu_custom_call.1} parent=15 // pred_check_branch
        %123 = sbr.rel (%p121) target = $region20
      $region19: #{tpu_custom_call.1} parent=15 // pred_region
        %p124 = scmp.lt.s32.totalorder %s15, 1
        %s125 = scalar_select %p124, %s15, 1
        %s126 = smul.addr %s125, 2
        %s127 = smul.addr %s126, 8
        %s128 = scalar_lea.vmem %s0, %s127
      $region20: #{tpu_custom_call.1} parent=15 // pred_fallthru
        _
      // Predicated region
      $region21: #{tpu_custom_call.1} parent=15 // pred_check
        %p129 = pneg %p68
      $region22: #{tpu_custom_call.1} parent=15 // pred_check_branch
        %131 = sbr.rel (%p129) target = $region24
      $region23: #{tpu_custom_call.1} parent=15 // pred_region
        %p132 = scmp.lt.s32.totalorder %s15, 1
        %s133 = scalar_select %p132, %s15, 1
        %p134 = scmp.lt.s32.totalorder %s16, 0
        %s135 = scalar_select %p134, %s16, 0
        %s136 = sadd.s32 %s135, %s133
        %s137 = smul.addr %s136, 8
        %s138 = scalar_lea.vmem %s1, %s137
      $region24: #{tpu_custom_call.1} parent=15 // pred_fallthru
        _
    $region16: #{tpu_custom_call.1} parent=5 // pred_fallthru
      _
    %p139 = scmp.le.s32.totalorder 1, %s8
    %p140 = scmp.lt.s32.totalorder %s8, 3
    %p141 = pnand %p139, %p140
    %p142 = pneg %p141
    // Predicated region
    $region25: #{tpu_custom_call.1} parent=5 // pred_check
      _
    $region26: #{tpu_custom_call.1} parent=5 // pred_check_branch
      %144 = sbr.rel (%p141) target = $region28
    $region27: #{tpu_custom_call.1} parent=5 // pred_region
      %s145 = ssub.s32 %s8, 1
      %p146 = scmp.lt.s32.totalorder %s17, 1
      %s147 = scalar_select %p146, %s17, 1
      %s148 = smul.addr %s147, 2
      %s149 = smul.addr %s148, 8
      %s150 = scalar_lea.vmem %s0, %s149
      %p151 = pneg %p46
      %p152 = pneg %p43
      %p153 = scmp.lt.s32.totalorder %s17, 1
      %s154 = scalar_select %p153, %s17, 1
      %p155 = scmp.lt.s32.totalorder %s18, 0
      %s156 = scalar_select %p155, %s18, 0
      %s157 = sadd.s32 %s156, %s154
      %s158 = smul.addr %s157, 8
      %s159 = scalar_lea.vmem %s1, %s158
      %p160 = pneg %p74
      %p161 = pneg %p71
      %p162 = pneg %p102
      %p163 = pneg %p99
      %p164 = scmp.lt.s32.totalorder %s17, 1
      %s165 = scalar_select %p164, %s17, 1
      %p166 = scmp.lt.s32.totalorder %s18, 0
      %s167 = scalar_select %p166, %s18, 0
      %s168 = smul.addr %s165, 2
      %s169 = sadd.s32 %s167, %s168
      %s170 = smul.addr %s169, 8
      %s171 = scalar_lea.vmem %s2, %s170
      %p172 = scmp.lt.s32.totalorder %s17, 1
      %s173 = scalar_select %p172, %s17, 1
      %s174 = smul.addr %s173, 2
      %s175 = smul.addr %s174, 8
      %s176 = scalar_lea.vmem %s0, %s175
      %p177 = scmp.lt.s32.totalorder %s17, 1
      %s178 = scalar_select %p177, %s17, 1
      %p179 = scmp.lt.s32.totalorder %s18, 0
      %s180 = scalar_select %p179, %s18, 0
      %s181 = sadd.s32 %s180, %s178
      %s182 = smul.addr %s181, 8
      %s183 = scalar_lea.vmem %s1, %s182
      %p184 = scmp.lt.s32.totalorder %s17, 1
      %s185 = scalar_select %p184, %s17, 1
      %p186 = scmp.lt.s32.totalorder %s18, 0
      %s187 = scalar_select %p186, %s18, 0
      %s188 = smul.addr %s185, 2
      %s189 = sadd.s32 %s187, %s188
      %s190 = smul.addr %s189, 8
      %s191 = scalar_lea.vmem %s2, %s190
      %v192 = vld [vmem:[%s176] sm:$0xff]
      %v193 = vld [vmem:[%s176 + $0x8] sm:$0xff]
      %v194 = vld [vmem:[%s183] sm:$0xff]
      %vm195 = vcmask 64512
      %v197 = vsel %vm195, %v192, 0
      %v200 = vsel %vm195, %v193, 0
      %v203 = vsel %vm195, %v194, 0
      %205 = vmatprep.subr.mxu0 0.0
      %206 = vmatpush1.xpose.msra.mxu0 %v203
      %207 = vmatprep.subr.mxu0 0.0
      %208 = vmatpush1.xpose.msra.mxu0 0.0
      %209 = vmatprep.subr.mxu0 0.0
      %210 = vmatpush1.xpose.msra.mxu0 0.0
      %211 = vmatprep.subr.mxu0 0.0
      %212 = vmatpush1.xpose.msra.mxu0 0.0
      %213 = vmatprep.subr.mxu0 0.0
      %214 = vmatpush1.xpose.msra.mxu0 0.0
      %215 = vmatprep.subr.mxu0 0.0
      %216 = vmatpush1.xpose.msra.mxu0 0.0
      %217 = vmatprep.subr.mxu0 0.0
      %218 = vmatpush1.xpose.msra.mxu0 0.0
      %219 = vmatprep.subr.mxu0 0.0
      %220 = vmatpush1.xpose.msra.mxu0 0.0
      %221 = vmatprep.subr.mxu0 0.0
      %222 = vmatpush1.xpose.msra.mxu0 0.0
      %223 = vmatprep.subr.mxu0 0.0
      %224 = vmatpush1.xpose.msra.mxu0 0.0
      %225 = vmatprep.subr.mxu0 0.0
      %226 = vmatpush1.xpose.msra.mxu0 0.0
      %227 = vmatprep.subr.mxu0 0.0
      %228 = vmatpush1.xpose.msra.mxu0 0.0
      %229 = vmatprep.subr.mxu0 0.0
      %230 = vmatpush1.xpose.msra.mxu0 0.0
      %231 = vmatprep.subr.mxu0 0.0
      %232 = vmatpush1.xpose.msra.mxu0 0.0
      %233 = vmatprep.subr.mxu0 0.0
      %234 = vmatpush1.xpose.msra.mxu0 0.0
      %235 = vmatprep.subr.mxu0 0.0
      %236 = vmatpush1.xpose.msra.mxu0 0.0
      %237 = vmatprep.subr.mxu0 0.0
      %238 = vmatpush1.xpose.msra.mxu0 0.0
      %239 = vmatprep.subr.mxu0 0.0
      %240 = vmatpush1.xpose.msra.mxu0 0.0
      %241 = vmatprep.subr.mxu0 0.0
      %242 = vmatpush1.xpose.msra.mxu0 0.0
      %243 = vmatprep.subr.mxu0 0.0
      %244 = vmatpush1.xpose.msra.mxu0 0.0
      %245 = vmatprep.subr.mxu0 0.0
      %246 = vmatpush1.xpose.msra.mxu0 0.0
      %247 = vmatprep.subr.mxu0 0.0
      %248 = vmatpush1.xpose.msra.mxu0 0.0
      %249 = vmatprep.subr.mxu0 0.0
      %250 = vmatpush1.xpose.msra.mxu0 0.0
      %251 = vmatprep.subr.mxu0 0.0
      %252 = vmatpush1.xpose.msra.mxu0 0.0
      %253 = vmatprep.subr.mxu0 0.0
      %254 = vmatpush1.xpose.msra.mxu0 0.0
      %255 = vmatprep.subr.mxu0 0.0
      %256 = vmatpush1.xpose.msra.mxu0 0.0
      %257 = vmatprep.subr.mxu0 0.0
      %258 = vmatpush1.xpose.msra.mxu0 0.0
      %259 = vmatprep.subr.mxu0 0.0
      %260 = vmatpush1.xpose.msra.mxu0 0.0
      %261 = vmatprep.subr.mxu0 0.0
      %262 = vmatpush1.xpose.msra.mxu0 0.0
      %263 = vmatprep.subr.mxu0 0.0
      %264 = vmatpush1.xpose.msra.mxu0 0.0
      %265 = vmatprep.subr.mxu0 0.0
      %266 = vmatpush1.xpose.msra.mxu0 0.0
      %267 = vmatprep.subr.mxu0 0.0
      %268 = vmatpush1.xpose.msra.mxu0 0.0
      %269 = vmatprep.mubr.f32.mxu0 0.0
      %270 = vmatmul.mubr.f32.gmra.mrb[0].mxu0 %v197
      %v271 = vpop.f32.mrb[0].mxu0
      %v272 = vadd.f32 0.0, %v271
      %v273 = vpop.f32.mrb[0].mxu0
      %274 = vmatprep.mubr.f32.mxu0 0.0
      %275 = vmatmul.mubr.f32.gmra.mrb[0].mxu0 %v200
      %v276 = vpop.f32.mrb[0].mxu0
      %v277 = vadd.f32 0.0, %v276
      %v278 = vpop.f32.mrb[0].mxu0
      %279 = vdwg.mxu0
      %v280 = vmax.f32 %v272, 0.0
      %v281 = vmax.f32 %v277, 0.0
      %282 = vst.msk [vmem:[%s191] sm:$0xff] %vm195, %v280
      %283 = vst.msk [vmem:[%s191 + $0x8] sm:$0xff] %vm195, %v281
      %p284 = scmp.lt.s32.totalorder %s17, 1
      %s285 = scalar_select %p284, %s17, 1
      %p286 = scmp.lt.s32.totalorder %s18, 0
      %s287 = scalar_select %p286, %s18, 0
      %s288 = smul.addr %s285, 2
      %s289 = sadd.s32 %s287, %s288
      %s290 = smul.addr %s289, 8
      %s291 = scalar_lea.vmem %s2, %s290
      // Predicated region
      $region29: #{tpu_custom_call.1} parent=27 // pred_check
        %p292 = pneg %p99
      $region30: #{tpu_custom_call.1} parent=27 // pred_check_branch
        %294 = sbr.rel (%p292) target = $region32
      $region31: #{tpu_custom_call.1} parent=27 // pred_region
        _
      $region32: #{tpu_custom_call.1} parent=27 // pred_fallthru
        _
    $region28: #{tpu_custom_call.1} parent=5 // pred_fallthru
      _
    %p295 = scmp.le.s32.totalorder 2, %s8
    // Predicated region
    $region33: #{tpu_custom_call.1} parent=5 // pred_check
      %p296 = pneg %p295
    $region34: #{tpu_custom_call.1} parent=5 // pred_check_branch
      %298 = sbr.rel (%p296) target = $region36
    $region35: #{tpu_custom_call.1} parent=5 // pred_region
      %s299 = ssub.s32 %s8, 2
      // Predicated region
      $region37: #{tpu_custom_call.1} parent=35 // pred_check
        %p300 = pneg %p105
      $region38: #{tpu_custom_call.1} parent=35 // pred_check_branch
        %302 = sbr.rel (%p300) target = $region40
      $region39: #{tpu_custom_call.1} parent=35 // pred_region
        %p303 = scmp.lt.s32.totalorder %s19, 1
        %s304 = scalar_select %p303, %s19, 1
        %p305 = scmp.lt.s32.totalorder %s20, 0
        %s306 = scalar_select %p305, %s20, 0
        %s307 = smul.addr %s304, 2
        %s308 = sadd.s32 %s306, %s307
        %s309 = smul.addr %s308, 8
        %s310 = scalar_lea.vmem %s2, %s309
      $region40: #{tpu_custom_call.1} parent=35 // pred_fallthru
        _
    $region36: #{tpu_custom_call.1} parent=5 // pred_fallthru
      _
  $region6: #{tpu_custom_call.1} parent=0 // loop_footer
    %s12 = sadd.s32 1, %s8
  $region7: #{tpu_custom_call.1} parent=0 // loop_footer_branch
    %7 = sbr.rel target = $region3
  $region8: #{tpu_custom_call.1} parent=0 // loop_exit
    _

</llo_original>
